<compile_context>
chip_gen: v5e
topology: v5e:2x2
jax: 0.10.0
libtpu: 0.0.40
codegen_flags: <defaults>
</compile_context>

<pallas_src>
import math

import jax
import jax.numpy as jnp
from jax import lax
from jax.experimental import pallas as pl
from jax.experimental.pallas import tpu as pltpu


def _track_embed_kernel(xr_ref, w_ref, b_ref, o_ref):
    # xr_ref: (TM, 8)  two packed rows: [x_e, y_e, cos_e, sin_e, x_o, y_o, cos_o, sin_o]
    # w_ref : (2, 2D)  [w0|w0 ; w1|w1]  (weight.T tiled across the two lane halves)
    # b_ref : (1, 2D)  [b|b]
    # o_ref : (TM, 2D) even row -> lanes [0, D), odd row -> lanes [D, 2D)
    xr = xr_ref[...]
    xe, ye, ce, se = xr[:, 0:1], xr[:, 1:2], xr[:, 2:3], xr[:, 3:4]
    xo, yo, co, so = xr[:, 4:5], xr[:, 5:6], xr[:, 6:7], xr[:, 7:8]

    # 2D rotation of each (x, y) pair (cos/sin precomputed in the wrapper).
    rx_e = xe * ce - ye * se
    ry_e = xe * se + ye * ce
    rx_o = xo * co - yo * so
    ry_o = xo * so + yo * co

    tm, lanes = o_ref.shape
    d = lanes // 2
    lane = lax.broadcasted_iota(jnp.int32, (tm, lanes), 1)
    left = lane < d                                   # lanes [0, D) -> even row

    rx = jnp.where(left, rx_e, rx_o)                  # (TM, 2D)
    ry = jnp.where(left, ry_e, ry_o)                  # (TM, 2D)

    # Linear(2 -> D) as a VPU broadcasted outer product + bias.
    out = rx * w_ref[0:1, :] + ry * w_ref[1:2, :] + b_ref[...]
    o_ref[...] = out.astype(o_ref.dtype)


def track_embedding(track_points, weight, bias, *, base: float = 10000.0,
                    block_packed_rows: int = 1024, out_dtype=jnp.float32):
    """track_points: (B, S, 2); weight: (D, 2) as in nn.Linear; bias: (D,)."""
    tp = jnp.asarray(track_points, jnp.float32)
    B, S, two = tp.shape
    assert two == 2, "Last dimension must be 2 for (x,y) pairs"
    w = jnp.asarray(weight, jnp.float32)
    b = jnp.asarray(bias, jnp.float32)
    D = w.shape[0]
    L = 2 * D

    # Batch-invariant rotation table: theta[s] = s * exp(-log(base)) = s / base.
    pos = jnp.arange(S, dtype=jnp.float32)[:, None]                    # (S, 1)
    theta = pos * jnp.float32(math.exp(-math.log(base)))
    cos_r = jnp.cos(theta)
    sin_r = jnp.sin(theta)

    # Per-row payload [x, y, cos, sin]; cos/sin are tiled per batch, so flattening
    # (B, S) -> rows never leaks positions across batch boundaries.
    rows = jnp.concatenate(
        [tp,
         jnp.broadcast_to(cos_r[None], (B, S, 1)),
         jnp.broadcast_to(sin_r[None], (B, S, 1))],
        axis=-1,
    ).reshape(B * S, 4)                                                # (R, 4)

    R = B * S
    R2 = pl.cdiv(R, 2)                                                 # packed rows needed
    tm = min(block_packed_rows, ((R2 + 7) // 8) * 8)                   # multiple of 8
    R2_pad = tm * pl.cdiv(R2, tm)
    R_pad = 2 * R2_pad

    rows = jnp.pad(rows, ((0, R_pad - R), (0, 0)))
    rows_packed = rows.reshape(R2_pad, 8)                              # 2 rows per packed row

    w_t = w.T                                                          # (2, D)
    w_tiled = jnp.concatenate([w_t, w_t], axis=1)                      # (2, 2D)
    b_tiled = jnp.concatenate([b, b]).reshape(1, L)                    # (1, 2D)

    out_packed = pl.pallas_call(
        _track_embed_kernel,
        out_shape=jax.ShapeDtypeStruct((R2_pad, L), out_dtype),
        grid_spec=pltpu.PrefetchScalarGridSpec(
            num_scalar_prefetch=0,
            grid=(R2_pad // tm,),
            in_specs=[
                pl.BlockSpec((tm, 8), lambda i: (i, 0)),               # packed-rows tile
                pl.BlockSpec((2, L), lambda i: (0, 0)),                # grid-invariant weight
                pl.BlockSpec((1, L), lambda i: (0, 0)),                # grid-invariant bias
            ],
            out_specs=pl.BlockSpec((tm, L), lambda i: (i, 0)),         # lane-dense store
        ),
        compiler_params=pltpu.CompilerParams(dimension_semantics=("parallel",)),
    )(rows_packed, w_tiled, b_tiled)

    # Unpack: (R2_pad, 2D) -> (R_pad, D) -> (B, S, D)
    return out_packed.reshape(R_pad, D)[:R].reshape(B, S, D)


def _reference(track_points, weight, bias, base=10000.0):
    B, S, _ = track_points.shape
    pos = jnp.arange(S, dtype=jnp.float32)
    theta = pos * jnp.float32(math.exp(-math.log(base)))
    cos_r, sin_r = jnp.cos(theta), jnp.sin(theta)            # (S,)
    xc, yc = track_points[..., 0], track_points[..., 1]      # (B, S)
    x_out = xc * cos_r - yc * sin_r
    y_out = xc * sin_r + yc * cos_r
    rotated = jnp.stack([x_out, y_out], axis=-1)              # (B, S, 2)
    return rotated @ weight.T + bias                          # (B, S, D)


if __name__ == "__main__":
    B, S, D = 2, 10, 64  # matches TrackEmbedding defaults (seq_len=10, d_model=64)
    key = jax.random.PRNGKey(0)
    k_x, k_w, k_b = jax.random.split(key, 3)

    track_points = jax.random.normal(k_x, (B, S, 2), dtype=jnp.float32)

    # Deterministic nn.Linear(2, D)-style init: U(-1/sqrt(in_features), 1/sqrt(in_features))
    bound = 1.0 / math.sqrt(2.0)
    weight = jax.random.uniform(k_w, (D, 2), jnp.float32, -bound, bound)
    bias = jax.random.uniform(k_b, (D,), jnp.float32, -bound, bound)

    out = track_embedding(track_points, weight, bias)
    out = jax.block_until_ready(out)

    ref = _reference(track_points, weight, bias)
    assert out.shape == (B, S, D)
    assert jnp.allclose(out, ref, atol=1e-5, rtol=1e-5), "mismatch vs JAX reference"
    print("KERNEL_OK")
</pallas_src>

<mosaic_0001>
module attributes {stable_mosaic.version = 11 : i64} {
  func.func @_track_embed_kernel(%arg0: i32, %arg1: memref<16x8xf32, #tpu.memory_space<vmem>>, %arg2: memref<2x128xf32, #tpu.memory_space<vmem>>, %arg3: memref<1x128xf32, #tpu.memory_space<vmem>>, %arg4: memref<16x128xf32, #tpu.memory_space<vmem>>) attributes {dimension_semantics = [#tpu.dimension_semantics<parallel>], iteration_bounds = array<i64: 1>, scalar_prefetch = 0 : i64, scratch_operands = 0 : i64, tpu.core_type = #tpu.core_type<tc>, window_params = [{transform_indices = @transform_0, window_bounds = array<i64: 16, 8>}, {pipeline_mode = #tpu.pipeline_mode<synchronous>, transform_indices = @transform_1, window_bounds = array<i64: 2, 128>}, {pipeline_mode = #tpu.pipeline_mode<synchronous>, transform_indices = @transform_2, window_bounds = array<i64: 1, 128>}, {transform_indices = @transform_3, window_bounds = array<i64: 16, 128>}]} {
    %c0 = arith.constant 0 : index
    %c0_0 = arith.constant 0 : index
    %0 = vector.load %arg1[%c0, %c0_0] : memref<16x8xf32, #tpu.memory_space<vmem>>, vector<16x8xf32>
    %1 = vector.extract_strided_slice %0 {offsets = [0, 0], sizes = [16, 1], strides = [1, 1]} : vector<16x8xf32> to vector<16x1xf32>
    %2 = vector.extract_strided_slice %0 {offsets = [0, 1], sizes = [16, 1], strides = [1, 1]} : vector<16x8xf32> to vector<16x1xf32>
    %3 = vector.extract_strided_slice %0 {offsets = [0, 2], sizes = [16, 1], strides = [1, 1]} : vector<16x8xf32> to vector<16x1xf32>
    %4 = vector.extract_strided_slice %0 {offsets = [0, 3], sizes = [16, 1], strides = [1, 1]} : vector<16x8xf32> to vector<16x1xf32>
    %5 = vector.extract_strided_slice %0 {offsets = [0, 4], sizes = [16, 1], strides = [1, 1]} : vector<16x8xf32> to vector<16x1xf32>
    %6 = vector.extract_strided_slice %0 {offsets = [0, 5], sizes = [16, 1], strides = [1, 1]} : vector<16x8xf32> to vector<16x1xf32>
    %7 = vector.extract_strided_slice %0 {offsets = [0, 6], sizes = [16, 1], strides = [1, 1]} : vector<16x8xf32> to vector<16x1xf32>
    %8 = vector.extract_strided_slice %0 {offsets = [0, 7], sizes = [16, 1], strides = [1, 1]} : vector<16x8xf32> to vector<16x1xf32>
    %9 = arith.mulf %1, %3 : vector<16x1xf32>
    %10 = arith.mulf %2, %4 : vector<16x1xf32>
    %11 = arith.subf %9, %10 : vector<16x1xf32>
    %12 = arith.mulf %1, %4 : vector<16x1xf32>
    %13 = arith.mulf %2, %3 : vector<16x1xf32>
    %14 = arith.addf %12, %13 : vector<16x1xf32>
    %15 = arith.mulf %5, %7 : vector<16x1xf32>
    %16 = arith.mulf %6, %8 : vector<16x1xf32>
    %17 = arith.subf %15, %16 : vector<16x1xf32>
    %18 = arith.mulf %5, %8 : vector<16x1xf32>
    %19 = arith.mulf %6, %7 : vector<16x1xf32>
    %20 = arith.addf %18, %19 : vector<16x1xf32>
    %21 = tpu.iota {dimensions = array<i32: 1>} : vector<16x128xi32>
    %c64_i32 = arith.constant 64 : i32
    %22 = vector.broadcast %c64_i32 : i32 to vector<16x128xi32>
    %23 = arith.cmpi slt, %21, %22 : vector<16x128xi32>
    %24 = vector.shape_cast %11 : vector<16x1xf32> to vector<16x1xf32>
    %25 = vector.broadcast %24 : vector<16x1xf32> to vector<16x128xf32>
    %26 = vector.shape_cast %17 : vector<16x1xf32> to vector<16x1xf32>
    %27 = vector.broadcast %26 : vector<16x1xf32> to vector<16x128xf32>
    %28 = arith.select %23, %25, %27 : vector<16x128xi1>, vector<16x128xf32>
    %29 = vector.shape_cast %14 : vector<16x1xf32> to vector<16x1xf32>
    %30 = vector.broadcast %29 : vector<16x1xf32> to vector<16x128xf32>
    %31 = vector.shape_cast %20 : vector<16x1xf32> to vector<16x1xf32>
    %32 = vector.broadcast %31 : vector<16x1xf32> to vector<16x128xf32>
    %33 = arith.select %23, %30, %32 : vector<16x128xi1>, vector<16x128xf32>
    %c0_1 = arith.constant 0 : index
    %c0_2 = arith.constant 0 : index
    %34 = vector.load %arg2[%c0_1, %c0_2] : memref<2x128xf32, #tpu.memory_space<vmem>>, vector<1x128xf32>
    %35 = vector.broadcast %34 : vector<1x128xf32> to vector<16x128xf32>
    %36 = arith.mulf %28, %35 : vector<16x128xf32>
    %c1 = arith.constant 1 : index
    %c0_3 = arith.constant 0 : index
    %37 = vector.load %arg2[%c1, %c0_3] : memref<2x128xf32, #tpu.memory_space<vmem>>, vector<1x128xf32>
    %38 = vector.broadcast %37 : vector<1x128xf32> to vector<16x128xf32>
    %39 = arith.mulf %33, %38 : vector<16x128xf32>
    %40 = arith.addf %36, %39 : vector<16x128xf32>
    %c0_4 = arith.constant 0 : index
    %c0_5 = arith.constant 0 : index
    %41 = vector.load %arg3[%c0_4, %c0_5] : memref<1x128xf32, #tpu.memory_space<vmem>>, vector<1x128xf32>
    %42 = vector.broadcast %41 : vector<1x128xf32> to vector<16x128xf32>
    %43 = arith.addf %40, %42 : vector<16x128xf32>
    %c0_6 = arith.constant 0 : index
    %c0_7 = arith.constant 0 : index
    %44 = vector.load %arg4[%c0_6, %c0_7] : memref<16x128xf32, #tpu.memory_space<vmem>>, vector<16x128xf32>
    tpu.vector_store %arg4[%c0_6, %c0_7], %43 {strides = array<i32>} : memref<16x128xf32, #tpu.memory_space<vmem>>, vector<16x128xf32>,
    return
  }
  func.func @transform_0(%arg0: i32) -> (i32, i32) {
    %c0_i32 = arith.constant 0 : i32
    %c0_i32_0 = arith.constant 0 : i32
    return %arg0, %c0_i32 : i32, i32
  }
  func.func @transform_1(%arg0: i32) -> (i32, i32) {
    %c0_i32 = arith.constant 0 : i32
    %c0_i32_0 = arith.constant 0 : i32
    %c0_i32_1 = arith.constant 0 : i32
    return %c0_i32, %c0_i32_0 : i32, i32
  }
  func.func @transform_2(%arg0: i32) -> (i32, i32) {
    %c0_i32 = arith.constant 0 : i32
    %c0_i32_0 = arith.constant 0 : i32
    %c0_i32_1 = arith.constant 0 : i32
    return %c0_i32, %c0_i32_0 : i32, i32
  }
  func.func @transform_3(%arg0: i32) -> (i32, i32) {
    %c0_i32 = arith.constant 0 : i32
    %c0_i32_0 = arith.constant 0 : i32
    return %arg0, %c0_i32 : i32, i32
  }
}

</mosaic_0001>

<llo_original>
// kernel: tpu_custom_call.1
$region0: #{tpu_custom_call.1}
  #allocation0 [shape = 'u32[]', space=smem, size = 0x4, offset = 0x4, fixed_abs, tag = 'smem constant byte address 0x4 - core index']
  #allocation1 [shape = 'u32[72,128]{1,0:T(1,128)}', space=vmem, size = 0x9000, scoped, tag = 'internal scratch']
  %s0 = inlined_call_operand.vmem [shape: f32[16,8], index: 0, kind: input, shape index: {}]
  %s1 = inlined_call_operand.vmem [shape: f32[2,128], index: 1, kind: input, shape index: {}]
  %s2 = inlined_call_operand.vmem [shape: f32[1,128], index: 2, kind: input, shape index: {}]
  %s3 = inlined_call_operand.hbm [shape: f32[16,128], index: 3, kind: output, shape index: {}]
  %s4 = sld [smem:[#allocation0]]
  $region22: #{tpu_custom_call.1} parent=0
    _
  %s6 = ssub.s32 1, %s4
  %s7 = scalar_select 0, %s6, %s4
  $region1: #{tpu_custom_call.1} parent=0
    #allocation2 [shape = 'u8[8192]{0}', space=vmem, size = 0x2000, scoped, tag = 'output window, operand 0, single buffered']
    #allocation3 [shape = 's32[1]{0}', space=sflag, size = 0x4, scoped, tag = 'scoped memory for tpu_custom_call.1']
    %8 = vsyncpa [#allocation3], 0
    // Predicated region
    $region2: #{tpu_custom_call.1} parent=1 // pred_check
      _
    $region3: #{tpu_custom_call.1} parent=1 // pred_check_branch
      %10 = sbr.rel (0) target = $region5
    $region4: #{tpu_custom_call.1} parent=1 // pred_region
      _
    $region5: #{tpu_custom_call.1} parent=1 // pred_fallthru
      _
    // Predicated region
    $region6: #{tpu_custom_call.1} parent=1 // pred_check
      _
    $region7: #{tpu_custom_call.1} parent=1 // pred_check_branch
      %12 = sbr.rel (0) target = $region9
    $region8: #{tpu_custom_call.1} parent=1 // pred_region
      _
    $region9: #{tpu_custom_call.1} parent=1 // pred_fallthru
      _
    // Predicated region
    $region10: #{tpu_custom_call.1} parent=1 // pred_check
      _
    $region11: #{tpu_custom_call.1} parent=1 // pred_check_branch
      %14 = sbr.rel (0) target = $region13
    $region12: #{tpu_custom_call.1} parent=1 // pred_region
      _
    $region13: #{tpu_custom_call.1} parent=1 // pred_fallthru
      _
    %v15 = vld [vmem:[%s0] sm:$0xff]
    %v16 = vld [vmem:[%s0 + $0x8] sm:$0xff]
    %19 = vrot.lane.b32.xlu0 %v15, 126
    %v20 = vpop.permute.xlu0 %19
    %21 = vrot.lane.b32.xlu0 %v16, 126
    %v22 = vpop.permute.xlu0 %21
    %v25 = vmul.f32 %v15, %v20
    %v26 = vmul.f32 %v16, %v22
    %29 = vrot.lane.b32.xlu0 %v25, 127
    %v30 = vpop.permute.xlu0 %29
    %31 = vrot.lane.b32.xlu0 %v26, 127
    %v32 = vpop.permute.xlu0 %31
    %v35 = vsub.f32 %v25, %v30
    %v36 = vsub.f32 %v26, %v32
    %37 = vrot.lane.b32.xlu0 %v15, 125
    %v38 = vpop.permute.xlu0 %37
    %39 = vrot.lane.b32.xlu0 %v16, 125
    %v40 = vpop.permute.xlu0 %39
    %v43 = vmul.f32 %v15, %v38
    %v44 = vmul.f32 %v16, %v40
    %45 = vrot.lane.b32.xlu0 %v15, 127
    %v46 = vpop.permute.xlu0 %45
    %47 = vrot.lane.b32.xlu0 %v16, 127
    %v48 = vpop.permute.xlu0 %47
    %v51 = vmul.f32 %v15, %v46
    %v52 = vmul.f32 %v16, %v48
    %55 = vrot.lane.b32.xlu0 %v51, 127
    %v56 = vpop.permute.xlu0 %55
    %57 = vrot.lane.b32.xlu0 %v52, 127
    %v58 = vpop.permute.xlu0 %57
    %v61 = vadd.f32 %v43, %v56
    %v62 = vadd.f32 %v44, %v58
    %v63 = vlaneseq
    %v64 = vand.u32 %v63, 127
    %vm65 = vcmp.lt.s32.totalorder %v64, 64
    %67 = vset.pattern.permute.xlu0 0
    %68 = vperm.xlu0 %67, %v35
    %v69 = vpop.permute.xlu0 %68
    %72 = vset.pattern.permute.xlu0 0
    %73 = vperm.xlu0 %72, %v36
    %v74 = vpop.permute.xlu0 %73
    %76 = vset.pattern.permute.xlu0 4
    %77 = vperm.xlu0 %76, %v35
    %v78 = vpop.permute.xlu0 %77
    %80 = vset.pattern.permute.xlu0 4
    %81 = vperm.xlu0 %80, %v36
    %v82 = vpop.permute.xlu0 %81
    %v84 = vsel %vm65, %v69, %v78
    %v85 = vsel %vm65, %v74, %v82
    %87 = vset.pattern.permute.xlu0 0
    %88 = vperm.xlu0 %87, %v61
    %v89 = vpop.permute.xlu0 %88
    %92 = vset.pattern.permute.xlu0 0
    %93 = vperm.xlu0 %92, %v62
    %v94 = vpop.permute.xlu0 %93
    %96 = vset.pattern.permute.xlu0 4
    %97 = vperm.xlu0 %96, %v61
    %v98 = vpop.permute.xlu0 %97
    %100 = vset.pattern.permute.xlu0 4
    %101 = vperm.xlu0 %100, %v62
    %v102 = vpop.permute.xlu0 %101
    %v104 = vsel %vm65, %v89, %v98
    %v105 = vsel %vm65, %v94, %v102
    %v106 = vld [vmem:[%s1] sm:$0x1]
    %v107 = vperm.slane %v106, 0
    %v108 = vmul.f32 %v84, %v107
    %v109 = vmul.f32 %v85, %v107
    %v110 = vld [vmem:[%s1 + $0x1] sm:$0x1]
    %v111 = vperm.slane %v110, 0
    %v112 = vmul.f32 %v104, %v111
    %v113 = vmul.f32 %v105, %v111
    %v114 = vadd.f32 %v108, %v112
    %v115 = vadd.f32 %v109, %v113
    %v116 = vld [vmem:[%s2] sm:$0x1]
    %v118 = vperm.slane %v116, 0
    %v120 = vadd.f32 %v114, %v118
    %v121 = vadd.f32 %v115, %v118
    %122 = vst [vmem:[#allocation2] sm:$0xff] %v120
    %123 = vst [vmem:[#allocation2 + $0x8] sm:$0xff] %v121
    // Predicated region
    $region14: #{tpu_custom_call.1} parent=1 // pred_check
      _
    $region15: #{tpu_custom_call.1} parent=1 // pred_check_branch
      %125 = sbr.rel (0) target = $region17
    $region16: #{tpu_custom_call.1} parent=1 // pred_region
      %127 = vsyncadd [#allocation3], 0
      %s128 = sshll.u32 [#allocation2], 4
      %s129 = int_to_ptr.vmem [resolvable:$true] %s128
      %s130 = sshll.u32 %s3, 4
      %s131 = int_to_ptr.hbm [resolvable:$true] %s130
      %136 = dma.vmem_to_hbm [thread:$0]  %s129, 256, %s131, [#allocation3], 128, 128, 8
    $region17: #{tpu_custom_call.1} parent=1 // pred_fallthru
      _
    // Predicated region
    $region18: #{tpu_custom_call.1} parent=1 // pred_check
      _
    $region19: #{tpu_custom_call.1} parent=1 // pred_check_branch
      %138 = sbr.rel (0) target = $region21
    $region20: #{tpu_custom_call.1} parent=1 // pred_region
      %140 = dma.done [#allocation3], 256
    $region21: #{tpu_custom_call.1} parent=1 // pred_fallthru
      _
    %141 = vsyncpa [#allocation3], 1

</llo_original>
